<compile_context>
chip_gen: v5e
topology: v5e:2x2
jax: 0.10.0
libtpu: 0.0.40
codegen_flags: <defaults>
</compile_context>

<pallas_src>
import jax
import jax.numpy as jnp
from jax.experimental import pallas as pl
from jax.experimental.pallas import tpu as pltpu


_VMEM_LIMIT = 32 * 1024 * 1024  # explicit scoped-VMEM budget (safe on v5e/v6e/v7x)


def _largest_divisor_leq(n, cap):
    cap = max(1, min(cap, n))
    for d in range(cap, 0, -1):
        if n % d == 0:
            return d
    return 1


# ----------------------------------------------------------------------------
# Kernel 1: ConvTranspose2d(kernel=2, stride=2) as row-blocked matmuls.
#
# For k=2/s=2 output pixels do not overlap:
#   out[n, 2h+dh, 2w+dw, oc] = sum_ic x[n, h, w, ic] * W[ic, oc, dh, dw] + b[oc]
# The kernel consumes x flattened to (N*H1*W1, Cin) and, per dh, does one
# (rows, Cin) x (Cin, 2*Cup) MXU matmul whose columns are ordered (dw, oc).
# The output array layout (N*H1, 2, W1, 2*Cup) is bit-identical to NHWC
# (N, 2*H1, 2*W1, Cup), so the wrapper reshape is free (no scatter/transpose).
# ----------------------------------------------------------------------------
def _deconv_kernel(x_ref, w_ref, b_ref, o_ref):
    # x_ref: (TR*W1, Cin) bf16   w_ref: (2, Cin, 2*Cup) bf16
    # b_ref: (1, 2*Cup) f32      o_ref: (TR, 2, W1, 2*Cup)
    tr, _, w1, c2 = o_ref.shape
    x = x_ref[...]
    for dh in range(2):
        y = jnp.dot(x, w_ref[dh], preferred_element_type=jnp.float32) + b_ref[...]
        o_ref[:, dh, :, :] = y.reshape(tr, w1, c2).astype(o_ref.dtype)


def conv_transpose_2x2(x1, w_up, b_up, row_block=None):
    """x1: (N, H1, W1, Cin) NHWC; w_up: torch layout (Cin, Cup, 2, 2)."""
    n, h1, w1, cin = x1.shape
    cup = w_up.shape[1]
    r1 = n * h1

    if row_block is None:
        row_block = max(1, 1024 // max(w1, 1))  # ~1k matmul rows per block
    # pick a divisor of N*H1 whose flattened row count is sublane (8) aligned
    tr = r1
    for d in range(_largest_divisor_leq(r1, row_block), 0, -1):
        if r1 % d == 0 and (d * w1) % 8 == 0:
            tr = d
            break

    # (Cin, Cup, 2, 2)[ic, oc, dh, dw] -> (2, Cin, 2*Cup)[dh, ic, dw*Cup + oc]
    w2 = jnp.transpose(w_up, (2, 0, 3, 1)).reshape(2, cin, 2 * cup).astype(x1.dtype)
    b2 = jnp.tile(b_up, 2).reshape(1, 2 * cup).astype(jnp.float32)
    x2d = x1.reshape(r1 * w1, cin)

    out = pl.pallas_call(
        _deconv_kernel,
        out_shape=jax.ShapeDtypeStruct((r1, 2, w1, 2 * cup), x1.dtype),
        grid=(r1 // tr,),
        in_specs=[
            pl.BlockSpec((tr * w1, cin), lambda i: (i, 0)),
            pl.BlockSpec((2, cin, 2 * cup), lambda i: (0, 0, 0)),
            pl.BlockSpec((1, 2 * cup), lambda i: (0, 0)),
        ],
        out_specs=pl.BlockSpec((tr, 2, w1, 2 * cup), lambda i: (i, 0, 0, 0)),
        compiler_params=pltpu.CompilerParams(
            dimension_semantics=("parallel",),
            vmem_limit_bytes=_VMEM_LIMIT,
        ),
    )(x2d, w2, b2)

    # free (contiguous) reshape to NHWC
    return out.reshape(n, 2 * h1, 2 * w1, cup)


# ----------------------------------------------------------------------------
# Kernel 2: fused 3x3 conv (padding handled by pre-padded input) + folded BN +
# ReLU, with the channel concat fused in (one ref + weight slice per source).
# Per grid step (one image): 9 taps x n_in inputs of (H*W, C_i) x (C_i, Cout)
# MXU matmuls accumulated in f32, then per-channel affine + ReLU on the VPU,
# one cast + lane-dense 2-D store.
# ----------------------------------------------------------------------------
def _make_conv_kernel(n_in, h, w):
    def kernel(*refs):
        x_refs = refs[:n_in]                 # each (Hp, Wp, C_i), batch squeezed
        w_refs = refs[n_in:2 * n_in]         # each (9, C_i, Cout)
        s_ref = refs[2 * n_in]               # (1, Cout) f32
        b_ref = refs[2 * n_in + 1]           # (1, Cout) f32
        o_ref = refs[2 * n_in + 2]           # (H*W, Cout)
        cout = o_ref.shape[-1]

        acc = jnp.zeros((h * w, cout), jnp.float32)
        for t in range(9):
            dy, dx = t // 3, t % 3
            for x_ref, w_ref in zip(x_refs, w_refs):
                c = x_ref.shape[-1]
                # slice the ref directly (no up-front full copy of the block)
                patch = x_ref[dy:dy + h, dx:dx + w, :].reshape(h * w, c)
                acc = acc + jnp.dot(
                    patch, w_ref[t], preferred_element_type=jnp.float32
                )
        # folded BN + ReLU in f32 (v5e has no bf16 VPU); cast only at the store
        y = jnp.maximum(acc * s_ref[...] + b_ref[...], 0.0)
        o_ref[...] = y.astype(o_ref.dtype)

    return kernel


def conv3x3_bn_relu(xs_padded, w_taps, scale, bias, out_dtype):
    """xs_padded: list of (N, Hp, Wp, C_i) zero-padded NHWC inputs (fused concat);
    w_taps: list of (9, C_i, Cout) tap weights; scale/bias: (1, Cout) folded BN."""
    n, hp, wp, _ = xs_padded[0].shape
    h, w = hp - 2, wp - 2
    cout = w_taps[0].shape[-1]
    n_in = len(xs_padded)

    in_specs = []
    for x in xs_padded:
        in_specs.append(
            pl.BlockSpec((None, hp, wp, x.shape[-1]), lambda b: (b, 0, 0, 0))
        )
    for wt in w_taps:
        in_specs.append(pl.BlockSpec((9, wt.shape[1], cout), lambda b: (0, 0, 0)))
    in_specs.append(pl.BlockSpec((1, cout), lambda b: (0, 0)))  # scale
    in_specs.append(pl.BlockSpec((1, cout), lambda b: (0, 0)))  # bias

    out = pl.pallas_call(
        _make_conv_kernel(n_in, h, w),
        out_shape=jax.ShapeDtypeStruct((n, h * w, cout), out_dtype),
        grid=(n,),
        in_specs=in_specs,
        out_specs=pl.BlockSpec((None, h * w, cout), lambda b: (b, 0, 0)),
        compiler_params=pltpu.CompilerParams(
            dimension_semantics=("parallel",),
            vmem_limit_bytes=_VMEM_LIMIT,
        ),
    )(*xs_padded, *w_taps, scale, bias)

    # metadata-only reshape of a contiguous array
    return out.reshape(n, h, w, cout)


# ----------------------------------------------------------------------------
# Parameter setup / folding (plain-JAX glue, torch layouts)
# ----------------------------------------------------------------------------
def init_params(key, in_ch, out_ch):
    ks = jax.random.split(key, 8)
    cup = in_ch // 2
    eps = 1e-5

    def bn(k, c):
        k1, k2, k3, k4 = jax.random.split(k, 4)
        gamma = 1.0 + 0.1 * jax.random.normal(k1, (c,), jnp.float32)
        beta = 0.1 * jax.random.normal(k2, (c,), jnp.float32)
        mean = 0.1 * jax.random.normal(k3, (c,), jnp.float32)
        var = 1.0 + 0.1 * jnp.abs(jax.random.normal(k4, (c,), jnp.float32))
        return gamma, beta, mean, var

    return {
        # ConvTranspose2d weight: torch layout (in_ch, out_ch, 2, 2)
        "up_w": 0.1 * jax.random.normal(ks[0], (in_ch, cup, 2, 2), jnp.float32),
        "up_b": 0.1 * jax.random.normal(ks[1], (cup,), jnp.float32),
        # Conv2d weights: torch layout (out, in, 3, 3)
        "c1_w": 0.1 * jax.random.normal(ks[2], (out_ch, in_ch, 3, 3), jnp.float32),
        "c1_b": 0.1 * jax.random.normal(ks[3], (out_ch,), jnp.float32),
        "c2_w": 0.1 * jax.random.normal(ks[4], (out_ch, out_ch, 3, 3), jnp.float32),
        "c2_b": 0.1 * jax.random.normal(ks[5], (out_ch,), jnp.float32),
        "bn1": bn(ks[6], out_ch),
        "bn2": bn(ks[7], out_ch),
        "eps": eps,
    }


def _fold_bn(conv_b, bn, eps):
    gamma, beta, mean, var = bn
    scale = gamma / jnp.sqrt(var + eps)
    bias = beta + scale * (conv_b - mean)
    return scale.reshape(1, -1).astype(jnp.float32), bias.reshape(1, -1).astype(jnp.float32)


def _conv_w_to_taps(w_oihw, dtype):
    # (O, I, 3, 3) -> (9, I, O) with tap index = dy*3 + dx
    o, i = w_oihw.shape[0], w_oihw.shape[1]
    return jnp.transpose(w_oihw, (2, 3, 1, 0)).reshape(9, i, o).astype(dtype)


# ----------------------------------------------------------------------------
# Public forward (NCHW in / NCHW out, like the PyTorch module)
# ----------------------------------------------------------------------------
def up_forward(x1_nchw, x2_nchw, params, row_block=None, compute_dtype=jnp.bfloat16):
    # NCHW -> NHWC; bf16 on the MXU path (f32 accumulation inside the kernels)
    x1 = jnp.transpose(x1_nchw, (0, 2, 3, 1)).astype(compute_dtype)
    x2 = jnp.transpose(x2_nchw, (0, 2, 3, 1)).astype(compute_dtype)
    n, h1, w1, cin = x1.shape
    cup = cin // 2
    eps = params["eps"]

    # ---- ConvTranspose2d(k=2, s=2): scatter written directly by the kernel ----
    x1_up = conv_transpose_2x2(
        x1, params["up_w"].astype(compute_dtype), params["up_b"], row_block=row_block
    )  # (N, 2*H1, 2*W1, Cup)

    # ---- pad: F.pad diff + 1-px conv halo merged into a single pad per input ----
    h2, w2 = x2.shape[1], x2.shape[2]
    diff_h = h2 - x1_up.shape[1]
    diff_w = w2 - x1_up.shape[2]
    x1_up_pad = jnp.pad(
        x1_up,
        ((0, 0),
         (1 + diff_h // 2, 1 + diff_h - diff_h // 2),
         (1 + diff_w // 2, 1 + diff_w - diff_w // 2),
         (0, 0)),
    )
    x2_pad = jnp.pad(x2, ((0, 0), (1, 1), (1, 1), (0, 0)))

    # ---- conv1: concat([x2, x1], C) fused by splitting the weight over C_in ----
    s1, b1 = _fold_bn(params["c1_b"], params["bn1"], eps)
    w1a = _conv_w_to_taps(params["c1_w"][:, :cup], compute_dtype)   # x2 channels
    w1b = _conv_w_to_taps(params["c1_w"][:, cup:], compute_dtype)   # x1_up channels
    h_act = conv3x3_bn_relu([x2_pad, x1_up_pad], [w1a, w1b], s1, b1, compute_dtype)

    # ---- conv2 ----
    s2, b2 = _fold_bn(params["c2_b"], params["bn2"], eps)
    w2t = _conv_w_to_taps(params["c2_w"], compute_dtype)
    h_pad = jnp.pad(h_act, ((0, 0), (1, 1), (1, 1), (0, 0)))
    out = conv3x3_bn_relu([h_pad], [w2t], s2, b2, jnp.float32)

    # NHWC -> NCHW
    return jnp.transpose(out, (0, 3, 1, 2))


if __name__ == "__main__":
    in_ch, out_ch = 8, 4
    key = jax.random.PRNGKey(0)
    k1, k2, kp = jax.random.split(key, 3)

    # x1: coarse feature map (N, in_ch, 8, 8); x2: skip connection (N, in_ch//2, 16, 16)
    x1 = jax.random.normal(k1, (2, in_ch, 8, 8), jnp.float32)
    x2 = jax.random.normal(k2, (2, in_ch // 2, 16, 16), jnp.float32)

    params = init_params(kp, in_ch, out_ch)

    # row_block=8 just so the tiny demo exercises a multi-step, pipelined grid.
    out = up_forward(x1, x2, params, row_block=8)
    jax.block_until_ready(out)
    assert out.shape == (2, out_ch, 16, 16), out.shape
    print("KERNEL_OK")
</pallas_src>

<mosaic_0001>
module attributes {stable_mosaic.version = 11 : i64} {
  func.func @_deconv_kernel(%arg0: i32, %arg1: memref<64x8xbf16, #tpu.memory_space<vmem>>, %arg2: memref<2x8x8xbf16, #tpu.memory_space<vmem>>, %arg3: memref<1x8xf32, #tpu.memory_space<vmem>>, %arg4: memref<8x2x8x8xbf16, #tpu.memory_space<vmem>>) attributes {dimension_semantics = [#tpu.dimension_semantics<parallel>], iteration_bounds = array<i64: 2>, scalar_prefetch = 0 : i64, scratch_operands = 0 : i64, tpu.core_type = #tpu.core_type<tc>, window_params = [{transform_indices = @transform_0, window_bounds = array<i64: 64, 8>}, {pipeline_mode = #tpu.pipeline_mode<synchronous>, transform_indices = @transform_1, window_bounds = array<i64: 2, 8, 8>}, {pipeline_mode = #tpu.pipeline_mode<synchronous>, transform_indices = @transform_2, window_bounds = array<i64: 1, 8>}, {transform_indices = @transform_3, window_bounds = array<i64: 8, 2, 8, 8>}]} {
    %c0 = arith.constant 0 : index
    %c0_0 = arith.constant 0 : index
    %0 = vector.load %arg1[%c0, %c0_0] : memref<64x8xbf16, #tpu.memory_space<vmem>>, vector<64x8xbf16>
    %c0_1 = arith.constant 0 : index
    %c0_2 = arith.constant 0 : index
    %c0_3 = arith.constant 0 : index
    %1 = vector.load %arg2[%c0_1, %c0_2, %c0_3] : memref<2x8x8xbf16, #tpu.memory_space<vmem>>, vector<1x8x8xbf16>
    %2 = vector.shape_cast %1 : vector<1x8x8xbf16> to vector<8x8xbf16>
    %cst = arith.constant dense<0.000000e+00> : vector<64x8xf32>
    %3 = tpu.matmul %0, %2, %cst {dimension_numbers = #tpu.dot_dimension_numbers<[1], [0], [0], [1], [0, 0, 1, 1], [], []>} : vector<64x8xbf16>, vector<8x8xbf16>, vector<64x8xf32> -> vector<64x8xf32>
    %c0_4 = arith.constant 0 : index
    %c0_5 = arith.constant 0 : index
    %4 = vector.load %arg3[%c0_4, %c0_5] : memref<1x8xf32, #tpu.memory_space<vmem>>, vector<1x8xf32>
    %5 = vector.broadcast %4 : vector<1x8xf32> to vector<64x8xf32>
    %6 = arith.addf %3, %5 : vector<64x8xf32>
    %7 = vector.shape_cast %6 : vector<64x8xf32> to vector<8x8x8xf32>
    %8 = arith.truncf %7 : vector<8x8x8xf32> to vector<8x8x8xbf16>
    %c0_6 = arith.constant 0 : index
    %c0_7 = arith.constant 0 : index
    %c0_8 = arith.constant 0 : index
    %c0_9 = arith.constant 0 : index
    %9 = vector.load %arg4[%c0_6, %c0_7, %c0_8, %c0_9] : memref<8x2x8x8xbf16, #tpu.memory_space<vmem>>, vector<8x1x8x8xbf16>
    %10 = vector.shape_cast %9 : vector<8x1x8x8xbf16> to vector<8x8x8xbf16>
    %11 = vector.shape_cast %8 : vector<8x8x8xbf16> to vector<8x1x8x8xbf16>
    tpu.vector_store %arg4[%c0_6, %c0_7, %c0_8, %c0_9], %11 {strides = array<i32>} : memref<8x2x8x8xbf16, #tpu.memory_space<vmem>>, vector<8x1x8x8xbf16>,
    %c1 = arith.constant 1 : index
    %c0_10 = arith.constant 0 : index
    %c0_11 = arith.constant 0 : index
    %12 = vector.load %arg2[%c1, %c0_10, %c0_11] : memref<2x8x8xbf16, #tpu.memory_space<vmem>>, vector<1x8x8xbf16>
    %13 = vector.shape_cast %12 : vector<1x8x8xbf16> to vector<8x8xbf16>
    %cst_12 = arith.constant dense<0.000000e+00> : vector<64x8xf32>
    %14 = tpu.matmul %0, %13, %cst_12 {dimension_numbers = #tpu.dot_dimension_numbers<[1], [0], [0], [1], [0, 0, 1, 1], [], []>} : vector<64x8xbf16>, vector<8x8xbf16>, vector<64x8xf32> -> vector<64x8xf32>
    %c0_13 = arith.constant 0 : index
    %c0_14 = arith.constant 0 : index
    %15 = vector.load %arg3[%c0_13, %c0_14] : memref<1x8xf32, #tpu.memory_space<vmem>>, vector<1x8xf32>
    %16 = vector.broadcast %15 : vector<1x8xf32> to vector<64x8xf32>
    %17 = arith.addf %14, %16 : vector<64x8xf32>
    %18 = vector.shape_cast %17 : vector<64x8xf32> to vector<8x8x8xf32>
    %19 = arith.truncf %18 : vector<8x8x8xf32> to vector<8x8x8xbf16>
    %c0_15 = arith.constant 0 : index
    %c1_16 = arith.constant 1 : index
    %c0_17 = arith.constant 0 : index
    %c0_18 = arith.constant 0 : index
    %20 = vector.load %arg4[%c0_15, %c1_16, %c0_17, %c0_18] : memref<8x2x8x8xbf16, #tpu.memory_space<vmem>>, vector<8x1x8x8xbf16>
    %21 = vector.shape_cast %20 : vector<8x1x8x8xbf16> to vector<8x8x8xbf16>
    %22 = vector.shape_cast %19 : vector<8x8x8xbf16> to vector<8x1x8x8xbf16>
    tpu.vector_store %arg4[%c0_15, %c1_16, %c0_17, %c0_18], %22 {strides = array<i32>} : memref<8x2x8x8xbf16, #tpu.memory_space<vmem>>, vector<8x1x8x8xbf16>,
    return
  }
  func.func @transform_0(%arg0: i32) -> (i32, i32) {
    %c0_i32 = arith.constant 0 : i32
    %c0_i32_0 = arith.constant 0 : i32
    return %arg0, %c0_i32 : i32, i32
  }
  func.func @transform_1(%arg0: i32) -> (i32, i32, i32) {
    %c0_i32 = arith.constant 0 : i32
    %c0_i32_0 = arith.constant 0 : i32
    %c0_i32_1 = arith.constant 0 : i32
    %c0_i32_2 = arith.constant 0 : i32
    return %c0_i32, %c0_i32_0, %c0_i32_1 : i32, i32, i32
  }
  func.func @transform_2(%arg0: i32) -> (i32, i32) {
    %c0_i32 = arith.constant 0 : i32
    %c0_i32_0 = arith.constant 0 : i32
    %c0_i32_1 = arith.constant 0 : i32
    return %c0_i32, %c0_i32_0 : i32, i32
  }
  func.func @transform_3(%arg0: i32) -> (i32, i32, i32, i32) {
    %c0_i32 = arith.constant 0 : i32
    %c0_i32_0 = arith.constant 0 : i32
    %c0_i32_1 = arith.constant 0 : i32
    %c0_i32_2 = arith.constant 0 : i32
    return %arg0, %c0_i32, %c0_i32_0, %c0_i32_1 : i32, i32, i32, i32
  }
}

</mosaic_0001>

<llo_original>
// kernel: tpu_custom_call.1
$region0: #{tpu_custom_call.1}
  #allocation0 [shape = 'u32[]', space=smem, size = 0x4, offset = 0x4, fixed_abs, tag = 'smem constant byte address 0x4 - core index']
  #allocation1 [shape = 'u32[72,128]{1,0:T(1,128)}', space=vmem, size = 0x9000, scoped, tag = 'internal scratch']
  %s0 = inlined_call_operand.vmem [shape: bf16[128,8], index: 0, kind: input, shape index: {}]
  %s1 = inlined_call_operand.vmem [shape: bf16[2,8,8], index: 1, kind: input, shape index: {}]
  %s2 = inlined_call_operand.vmem [shape: f32[1,8], index: 2, kind: input, shape index: {}]
  %s3 = inlined_call_operand.vmem [shape: bf16[16,2,8,8], index: 3, kind: output, shape index: {}]
  %s4 = sld [smem:[#allocation0]]
  $region45: #{tpu_custom_call.1} parent=0
    _
  %s6 = ssub.s32 1, %s4
  %s7 = scalar_select 0, %s6, %s4
  loop: start=0, step=1, limit=4
  $region2: #{tpu_custom_call.1} parent=0 // loop_pre_header
    _
  $region3: #{tpu_custom_call.1} parent=0 // loop_header
    %s9 = sphi 0, %s13
    %p10 = scmp.ge.s32.totalorder %s9, 4
    %s19 = sphi 0, %s21
    %s22 = sphi 0, %s19
    %s23 = sphi 0, %s22
    %s39 = sphi 0, %s23
    %s43 = sphi 0, %s43
    %s45 = sphi 0, %s43
    %s46 = sphi 0, %s45
    %s60 = sphi 0, %s46
    %s64 = sphi 0, %s64
    %s66 = sphi 0, %s64
    %s67 = sphi 0, %s66
    %s81 = sphi 0, %s67
    %s87 = sphi 0, %s89
    %s90 = sphi 0, %s87
    %s91 = sphi 0, %s90
    %s107 = sphi 0, %s91
  $region4: #{tpu_custom_call.1} parent=0 // loop_header_branch
    %12 = sbr.rel (%p10) target = $region8
  $region5: #{tpu_custom_call.1} parent=0 // loop_body
    %s14 = ssub.s32 %s9, 1
    %s15 = ssub.s32 %s9, 2
    %s16 = sadd.s32 %s9, 1
    %s17 = ssub.s32 %s9, %s16
    %p18 = scmp.eq.s32.totalorder %s17, 0
    %s20 = sadd.s32 %s19, 1
    %s21 = scalar_select %p18, %s19, %s20
    %p24 = pneg %p18
    %p25 = scmp.eq.s32.totalorder %s9, 1
    %p26 = por %p24, %p25
    %p27 = scmp.ne.s32.totalorder %s19, %s22
    %p28 = scmp.eq.s32.totalorder %s9, 0
    %p29 = por %p27, %p28
    %p30 = scmp.ne.s32.totalorder %s19, %s22
    %p31 = scmp.eq.s32.totalorder %s14, 1
    %p32 = por %p30, %p31
    %p33 = scmp.ne.s32.totalorder %s22, %s23
    %p34 = scmp.eq.s32.totalorder %s14, 0
    %p35 = por %p33, %p34
    %p36 = scmp.ne.s32.totalorder %s22, %s23
    %p37 = scmp.eq.s32.totalorder %s15, 1
    %p38 = por %p36, %p37
    %p40 = scmp.ne.s32.totalorder %s23, %s39
    %p41 = scmp.eq.s32.totalorder %s15, 0
    %p42 = por %p40, %p41
    %s44 = sadd.s32 %s43, 1
    %p47 = scmp.eq.s32.totalorder %s9, 1
    %p48 = scmp.ne.s32.totalorder %s43, %s45
    %p49 = scmp.eq.s32.totalorder %s9, 0
    %p50 = por %p48, %p49
    %p51 = scmp.ne.s32.totalorder %s43, %s45
    %p52 = scmp.eq.s32.totalorder %s14, 1
    %p53 = por %p51, %p52
    %p54 = scmp.ne.s32.totalorder %s45, %s46
    %p55 = scmp.eq.s32.totalorder %s14, 0
    %p56 = por %p54, %p55
    %p57 = scmp.ne.s32.totalorder %s45, %s46
    %p58 = scmp.eq.s32.totalorder %s15, 1
    %p59 = por %p57, %p58
    %p61 = scmp.ne.s32.totalorder %s46, %s60
    %p62 = scmp.eq.s32.totalorder %s15, 0
    %p63 = por %p61, %p62
    %s65 = sadd.s32 %s64, 1
    %p68 = scmp.eq.s32.totalorder %s9, 1
    %p69 = scmp.ne.s32.totalorder %s64, %s66
    %p70 = scmp.eq.s32.totalorder %s9, 0
    %p71 = por %p69, %p70
    %p72 = scmp.ne.s32.totalorder %s64, %s66
    %p73 = scmp.eq.s32.totalorder %s14, 1
    %p74 = por %p72, %p73
    %p75 = scmp.ne.s32.totalorder %s66, %s67
    %p76 = scmp.eq.s32.totalorder %s14, 0
    %p77 = por %p75, %p76
    %p78 = scmp.ne.s32.totalorder %s66, %s67
    %p79 = scmp.eq.s32.totalorder %s15, 1
    %p80 = por %p78, %p79
    %p82 = scmp.ne.s32.totalorder %s67, %s81
    %p83 = scmp.eq.s32.totalorder %s15, 0
    %p84 = por %p82, %p83
    %s85 = ssub.s32 %s9, %s16
    %p86 = scmp.eq.s32.totalorder %s85, 0
    %s88 = sadd.s32 %s87, 1
    %s89 = scalar_select %p86, %s87, %s88
    %p92 = pneg %p86
    %p93 = scmp.eq.s32.totalorder %s9, 1
    %p94 = por %p92, %p93
    %p95 = scmp.ne.s32.totalorder %s87, %s90
    %p96 = scmp.eq.s32.totalorder %s9, 0
    %p97 = por %p95, %p96
    %p98 = scmp.ne.s32.totalorder %s87, %s90
    %p99 = scmp.eq.s32.totalorder %s14, 1
    %p100 = por %p98, %p99
    %p101 = scmp.ne.s32.totalorder %s90, %s91
    %p102 = scmp.eq.s32.totalorder %s14, 0
    %p103 = por %p101, %p102
    %p104 = scmp.ne.s32.totalorder %s90, %s91
    %p105 = scmp.eq.s32.totalorder %s15, 1
    %p106 = por %p104, %p105
    %p108 = scmp.ne.s32.totalorder %s91, %s107
    %p109 = scmp.eq.s32.totalorder %s15, 0
    %p110 = por %p108, %p109
    %p111 = scmp.le.s32.totalorder 1, %s9
    %p112 = scmp.lt.s32.totalorder %s9, 3
    %p113 = pnand %p111, %p112
    %p114 = pneg %p113
    // Predicated region
    $region9: #{tpu_custom_call.1} parent=5 // pred_check
      _
    $region10: #{tpu_custom_call.1} parent=5 // pred_check_branch
      %116 = sbr.rel (%p113) target = $region12
    $region11: #{tpu_custom_call.1} parent=5 // pred_region
      %s117 = ssub.s32 %s9, 1
      // Predicated region
      $region13: #{tpu_custom_call.1} parent=11 // pred_check
        %p118 = pneg %p56
      $region14: #{tpu_custom_call.1} parent=11 // pred_check_branch
        %120 = sbr.rel (%p118) target = $region16
      $region15: #{tpu_custom_call.1} parent=11 // pred_region
        _
      $region16: #{tpu_custom_call.1} parent=11 // pred_fallthru
        _
      // Predicated region
      $region17: #{tpu_custom_call.1} parent=11 // pred_check
        %p121 = pneg %p77
      $region18: #{tpu_custom_call.1} parent=11 // pred_check_branch
        %123 = sbr.rel (%p121) target = $region20
      $region19: #{tpu_custom_call.1} parent=11 // pred_region
        _
      $region20: #{tpu_custom_call.1} parent=11 // pred_fallthru
        _
    $region12: #{tpu_custom_call.1} parent=5 // pred_fallthru
      _
    %p124 = scmp.lt.s32.totalorder %s9, 2
    // Predicated region
    $region21: #{tpu_custom_call.1} parent=5 // pred_check
      %p125 = pneg %p124
    $region22: #{tpu_custom_call.1} parent=5 // pred_check_branch
      %127 = sbr.rel (%p125) target = $region24
    $region23: #{tpu_custom_call.1} parent=5 // pred_region
      // Predicated region
      $region25: #{tpu_custom_call.1} parent=23 // pred_check
        %p128 = pneg %p29
      $region26: #{tpu_custom_call.1} parent=23 // pred_check_branch
        %130 = sbr.rel (%p128) target = $region28
      $region27: #{tpu_custom_call.1} parent=23 // pred_region
        %s131 = smul.u32 8, %s9
        %p132 = scmp.lt.s32.totalorder %s131, 15
        %s133 = scalar_select %p132, %s131, 15
        %s134 = smul.addr %s133, 4
        %s135 = scalar_lea.vmem %s0, %s134
        %s136 = smul.u32 8, %s9
      $region28: #{tpu_custom_call.1} parent=23 // pred_fallthru
        _
    $region24: #{tpu_custom_call.1} parent=5 // pred_fallthru
      _
    %p137 = scmp.le.s32.totalorder 1, %s9
    %p138 = scmp.lt.s32.totalorder %s9, 3
    %p139 = pnand %p137, %p138
    %p140 = pneg %p139
    // Predicated region
    $region29: #{tpu_custom_call.1} parent=5 // pred_check
      _
    $region30: #{tpu_custom_call.1} parent=5 // pred_check_branch
      %142 = sbr.rel (%p139) target = $region32
    $region31: #{tpu_custom_call.1} parent=5 // pred_region
      %s143 = ssub.s32 %s9, 1
      %s144 = smul.u32 8, %s14
      %p145 = scmp.lt.s32.totalorder %s144, 15
      %s146 = scalar_select %p145, %s144, 15
      %s147 = smul.addr %s146, 4
      %s148 = scalar_lea.vmem %s0, %s147
      %p149 = pneg %p35
      %p150 = pneg %p32
      %p151 = pneg %p56
      %p152 = pneg %p53
      %p153 = pneg %p77
      %p154 = pneg %p74
      %p155 = pneg %p103
      %p156 = pneg %p100
      %s157 = smul.u32 8, %s14
      %p158 = scmp.lt.s32.totalorder %s157, 15
      %s159 = scalar_select %p158, %s157, 15
      %s160 = smul.addr %s159, 2
      %s161 = smul.addr %s160, 4
      %s162 = scalar_lea.vmem %s3, %s161
      %s163 = smul.u32 8, %s14
      %p164 = scmp.lt.s32.totalorder %s163, 15
      %s165 = scalar_select %p164, %s163, 15
      %s166 = smul.addr %s165, 4
      %s167 = scalar_lea.vmem %s0, %s166
      %s168 = smul.u32 8, %s14
      %s169 = smul.u32 8, %s14
      %p170 = scmp.lt.s32.totalorder %s169, 15
      %s171 = scalar_select %p170, %s169, 15
      %s172 = smul.addr %s171, 2
      %s173 = smul.addr %s172, 4
      %s174 = scalar_lea.vmem %s3, %s173
      %s175 = smul.u32 8, %s14
      %v177 = vld [vmem:[%s167] sm:$0xf]
      %v178 = vld [vmem:[%s167 + $0x4] sm:$0xf]
      %v179 = vld [vmem:[%s167 + $0x8] sm:$0xf]
      %v180 = vld [vmem:[%s167 + $0xc] sm:$0xf]
      %v181 = vld [vmem:[%s167 + $0x10] sm:$0xf]
      %v182 = vld [vmem:[%s167 + $0x14] sm:$0xf]
      %v183 = vld [vmem:[%s167 + $0x18] sm:$0xf]
      %v184 = vld [vmem:[%s167 + $0x1c] sm:$0xf]
      %v185 = vld [vmem:[%s1] sm:$0xf]
      %v186 = vld [vmem:[%s2] sm:$0x1]
      %v188 = vperm.slane %v186, 0
      %v198 = vunpack.c.l.b16 %v177
      %v199 = vunpack.c.l.b16 %v178
      %v200 = vunpack.c.l.b16 %v179
      %v201 = vunpack.c.l.b16 %v180
      %v202 = vunpack.c.l.b16 %v181
      %v203 = vunpack.c.l.b16 %v182
      %v204 = vunpack.c.l.b16 %v183
      %v205 = vunpack.c.l.b16 %v184
      %v206 = vpack.c.b16 %v199, %v198
      %v207 = vpack.c.b16 %v201, %v200
      %v208 = vpack.c.b16 %v203, %v202
      %v209 = vpack.c.b16 %v205, %v204
      %vm210 = vcmask 64512
      %v212 = vsel %vm210, %v206, 0
      %v215 = vsel %vm210, %v207, 0
      %v218 = vsel %vm210, %v208, 0
      %v221 = vsel %vm210, %v209, 0
      %vm223 = vcmask 1043456
      %v225 = vsel %vm223, %v185, 0
      %227 = vmatpush.bf16.msra.mxu0 0
      %228 = vmatpush.bf16.msra.mxu0 0
      %229 = vmatpush.bf16.msra.mxu0 0
      %230 = vmatpush.bf16.msra.mxu0 0
      %231 = vmatpush.bf16.msra.mxu0 0
      %232 = vmatpush.bf16.msra.mxu0 0
      %233 = vmatpush.bf16.msra.mxu0 0
      %234 = vmatpush.bf16.msra.mxu0 %v225
      %235 = vmatmul.bf16.gmra.mxu0 %v212
      %v236 = vpop.f32.mrf.mxu0
      %v237 = vadd.f32 %v188, %v236
      %v238 = vpop.f32.mrf.mxu0
      %v239 = vadd.f32 %v188, %v238
      %240 = vmatmul.bf16.gmra.mxu0 %v215
      %v241 = vpop.f32.mrf.mxu0
      %v242 = vadd.f32 %v188, %v241
      %v243 = vpop.f32.mrf.mxu0
      %v244 = vadd.f32 %v188, %v243
      %245 = vmatmul.bf16.gmra.mxu0 %v218
      %v246 = vpop.f32.mrf.mxu0
      %v247 = vadd.f32 %v188, %v246
      %v248 = vpop.f32.mrf.mxu0
      %v249 = vadd.f32 %v188, %v248
      %250 = vmatmul.bf16.gmra.mxu0 %v221
      %v251 = vpop.f32.mrf.mxu0
      %v252 = vadd.f32 %v188, %v251
      %v253 = vpop.f32.mrf.mxu0
      %v254 = vadd.f32 %v188, %v253
      %255 = vdwg.mxu0
      %v256 = vpack.c.bf16 %v237, %v237
      %v257 = vpack.c.bf16 %v239, %v239
      %v258 = vpack.c.bf16 %v242, %v242
      %v259 = vpack.c.bf16 %v244, %v244
      %v260 = vpack.c.bf16 %v247, %v247
      %v261 = vpack.c.bf16 %v249, %v249
      %v262 = vpack.c.bf16 %v252, %v252
      %v263 = vpack.c.bf16 %v254, %v254
      %vm264 = vcmask 60416
      %265 = vst.msk [vmem:[%s174] sm:$0xf] %vm264, %v256
      %266 = vst.msk [vmem:[%s174 + $0x8] sm:$0xf] %vm264, %v257
      %267 = vst.msk [vmem:[%s174 + $0x10] sm:$0xf] %vm264, %v258
      %268 = vst.msk [vmem:[%s174 + $0x18] sm:$0xf] %vm264, %v259
      %269 = vst.msk [vmem:[%s174 + $0x20] sm:$0xf] %vm264, %v260
      %270 = vst.msk [vmem:[%s174 + $0x28] sm:$0xf] %vm264, %v261
      %271 = vst.msk [vmem:[%s174 + $0x30] sm:$0xf] %vm264, %v262
      %272 = vst.msk [vmem:[%s174 + $0x38] sm:$0xf] %vm264, %v263
      %s273 = scalar_lea.vmem %s1, 4
      %v274 = vld [vmem:[%s273] sm:$0xf]
      %v275 = vld [vmem:[%s2] sm:$0x1]
      %v277 = vperm.slane %v275, 0
      %v280 = vsel %vm223, %v274, 0
      %282 = vmatpush.bf16.msra.mxu0 0
      %283 = vmatpush.bf16.msra.mxu0 0
      %284 = vmatpush.bf16.msra.mxu0 0
      %285 = vmatpush.bf16.msra.mxu0 0
      %286 = vmatpush.bf16.msra.mxu0 0
      %287 = vmatpush.bf16.msra.mxu0 0
      %288 = vmatpush.bf16.msra.mxu0 0
      %289 = vmatpush.bf16.msra.mxu0 %v280
      %290 = vmatmul.bf16.gmra.mxu0 %v212
      %v291 = vpop.f32.mrf.mxu0
      %v292 = vadd.f32 %v277, %v291
      %v293 = vpop.f32.mrf.mxu0
      %v294 = vadd.f32 %v277, %v293
      %295 = vmatmul.bf16.gmra.mxu0 %v215
      %v296 = vpop.f32.mrf.mxu0
      %v297 = vadd.f32 %v277, %v296
      %v298 = vpop.f32.mrf.mxu0
      %v299 = vadd.f32 %v277, %v298
      %300 = vmatmul.bf16.gmra.mxu0 %v218
      %v301 = vpop.f32.mrf.mxu0
      %v302 = vadd.f32 %v277, %v301
      %v303 = vpop.f32.mrf.mxu0
      %v304 = vadd.f32 %v277, %v303
      %305 = vmatmul.bf16.gmra.mxu0 %v221
      %v306 = vpop.f32.mrf.mxu0
      %v307 = vadd.f32 %v277, %v306
      %v308 = vpop.f32.mrf.mxu0
      %v309 = vadd.f32 %v277, %v308
      %310 = vdwg.mxu0
      %v311 = vpack.c.bf16 %v292, %v292
      %v312 = vpack.c.bf16 %v294, %v294
      %v313 = vpack.c.bf16 %v297, %v297
      %v314 = vpack.c.bf16 %v299, %v299
      %v315 = vpack.c.bf16 %v302, %v302
      %v316 = vpack.c.bf16 %v304, %v304
      %v317 = vpack.c.bf16 %v307, %v307
      %v318 = vpack.c.bf16 %v309, %v309
      %s319 = scalar_lea.vmem %s174, 4
      %320 = vst.msk [vmem:[%s319] sm:$0xf] %vm264, %v311
      %321 = vst.msk [vmem:[%s319 + $0x8] sm:$0xf] %vm264, %v312
      %322 = vst.msk [vmem:[%s319 + $0x10] sm:$0xf] %vm264, %v313
      %323 = vst.msk [vmem:[%s319 + $0x18] sm:$0xf] %vm264, %v314
      %324 = vst.msk [vmem:[%s319 + $0x20] sm:$0xf] %vm264, %v315
      %325 = vst.msk [vmem:[%s319 + $0x28] sm:$0xf] %vm264, %v316
      %326 = vst.msk [vmem:[%s319 + $0x30] sm:$0xf] %vm264, %v317
      %327 = vst.msk [vmem:[%s319 + $0x38] sm:$0xf] %vm264, %v318
      %s328 = smul.u32 8, %s14
      %p329 = scmp.lt.s32.totalorder %s328, 15
      %s330 = scalar_select %p329, %s328, 15
      %s331 = smul.addr %s330, 2
      %s332 = smul.addr %s331, 4
      %s333 = scalar_lea.vmem %s3, %s332
      // Predicated region
      $region33: #{tpu_custom_call.1} parent=31 // pred_check
        %p334 = pneg %p100
      $region34: #{tpu_custom_call.1} parent=31 // pred_check_branch
        %336 = sbr.rel (%p334) target = $region36
      $region35: #{tpu_custom_call.1} parent=31 // pred_region
        %s337 = smul.u32 8, %s14
      $region36: #{tpu_custom_call.1} parent=31 // pred_fallthru
        _
    $region32: #{tpu_custom_call.1} parent=5 // pred_fallthru
      _
    %p338 = scmp.le.s32.totalorder 2, %s9
    // Predicated region
    $region37: #{tpu_custom_call.1} parent=5 // pred_check
      %p339 = pneg %p338
    $region38: #{tpu_custom_call.1} parent=5 // pred_check_branch
      %341 = sbr.rel (%p339) target = $region40
    $region39: #{tpu_custom_call.1} parent=5 // pred_region
      %s342 = ssub.s32 %s9, 2
      // Predicated region
      $region41: #{tpu_custom_call.1} parent=39 // pred_check
        %p343 = pneg %p106
      $region42: #{tpu_custom_call.1} parent=39 // pred_check_branch
        %345 = sbr.rel (%p343) target = $region44
      $region43: #{tpu_custom_call.1} parent=39 // pred_region
        %s346 = smul.u32 8, %s15
        %p347 = scmp.lt.s32.totalorder %s346, 15
        %s348 = scalar_select %p347, %s346, 15
        %s349 = smul.addr %s348, 2
        %s350 = smul.addr %s349, 4
        %s351 = scalar_lea.vmem %s3, %s350
      $region44: #{tpu_custom_call.1} parent=39 // pred_fallthru
        _
    $region40: #{tpu_custom_call.1} parent=5 // pred_fallthru
      _
  $region6: #{tpu_custom_call.1} parent=0 // loop_footer
    %s13 = sadd.s32 1, %s9
  $region7: #{tpu_custom_call.1} parent=0 // loop_footer_branch
    %8 = sbr.rel target = $region3
  $region8: #{tpu_custom_call.1} parent=0 // loop_exit
    _

</llo_original>
